<compile_context>
chip_gen: v6e
topology: v6e:2x2x1
jax: 0.10.0
libtpu: 0.0.40
codegen_flags: <defaults>
</compile_context>

<pallas_src>
import jax
import jax.numpy as jnp
from jax.experimental import pallas as pl
from jax.experimental.pallas import tpu as pltpu

_LANE = 128
_MiB = 1024 * 1024
# Per-block (one operand) byte budget: big enough that per-grid-step overhead
# is negligible even at v7x HBM bandwidth, small enough that double-buffered
# in+out (4x) plus headroom fits every generation's VMEM.
_BLOCK_BYTES_BUDGET = 8 * _MiB
_VMEM_HEADROOM = 8 * _MiB  # room for compiler-internal scratch


def _vmem_capacity_bytes() -> int:
    """Physical VMEM per TensorCore; conservative (v7x-sized) default if the query fails."""
    try:
        info = pltpu.get_tpu_info()
        cap = int(getattr(info, "vmem_capacity_bytes", 0))
        if cap > 0:
            return cap
    except Exception:
        pass
    return 64 * _MiB


def _largest_divisor_leq(n: int, cap: int) -> int:
    cap = max(1, min(n, cap))
    for d in range(cap, 0, -1):
        if n % d == 0:
            return d
    return 1


def _vmem_limit_bytes(block_bytes: int, limit_cap: int) -> int:
    need = 4 * block_bytes + _VMEM_HEADROOM  # 2 operands, double-buffered
    return int(min(limit_cap, max(32 * _MiB, need)))


# ---------------------------------------------------------------------------
# Kernels
# ---------------------------------------------------------------------------

def _copy_kernel(x_ref, o_ref):
    # x_ref: (Bt, 1, cpg, hw_tile) ; o_ref: (Bt, cpg, hw_tile).
    # The (groups, cpg) channel permutation is expressed purely by the
    # BlockSpec index maps, so the body is a plain lane-dense tile copy.
    o_ref[...] = x_ref[:, 0, :, :]


def _shuffle_tile_kernel(x_ref, o_ref):
    # x_ref: (Bt, groups, cpg_t, HW) ; o_ref: (Bt, cpg_t, groups, HW).
    # Swap the two channel axes in-register; unroll over the smaller axis so
    # the body is a few simple sub-ref copies (groups/cpg are small in practice).
    groups = x_ref.shape[1]
    cpg_t = x_ref.shape[2]
    if groups <= cpg_t:
        for g in range(groups):
            o_ref[:, :, g, :] = x_ref[:, g, :, :]
    else:
        for i in range(cpg_t):
            o_ref[:, i, :, :] = x_ref[:, :, i, :]


# ---------------------------------------------------------------------------
# Wrappers around pallas_call
# ---------------------------------------------------------------------------

def _shuffle_lane_aligned(x3: jax.Array, groups: int, block_budget: int,
                          limit_cap: int) -> jax.Array:
    """Pure-DMA shuffle; requires the spatial extent to be a multiple of 128."""
    B, C, HWp = x3.shape
    assert HWp % _LANE == 0
    cpg = C // groups
    itemsize = jnp.dtype(x3.dtype).itemsize

    # Largest lane-multiple divisor of HWp whose (cpg, hw_tile) slab fits budget.
    m = HWp // _LANE
    d_cap = max(1, block_budget // (cpg * _LANE * itemsize))
    hw_tile = _largest_divisor_leq(m, d_cap) * _LANE
    n_hw = HWp // hw_tile
    # Fold batch into the block so small layers still move multi-MB tiles.
    bt_cap = max(1, block_budget // (cpg * hw_tile * itemsize))
    Bt = _largest_divisor_leq(B, bt_cap)

    block_bytes = Bt * cpg * hw_tile * itemsize
    x4 = x3.reshape(B, groups, cpg, HWp)

    out = pl.pallas_call(
        _copy_kernel,
        out_shape=jax.ShapeDtypeStruct((B, cpg, groups * HWp), x3.dtype),
        grid=(B // Bt, groups, n_hw),
        in_specs=[
            # Input viewed as (B, groups, cpg, HW): all cpg channels of group g.
            pl.BlockSpec((Bt, 1, cpg, hw_tile), lambda b, g, h: (b, g, 0, h)),
        ],
        # Output viewed as (B, cpg, groups*HW): group g lands at lane offset
        # g*HW, i.e. output channel i*groups + g after the (free) final reshape.
        out_specs=pl.BlockSpec(
            (Bt, cpg, hw_tile), lambda b, g, h: (b, 0, g * n_hw + h)
        ),
        compiler_params=pltpu.CompilerParams(
            dimension_semantics=("parallel", "parallel", "parallel"),
            vmem_limit_bytes=_vmem_limit_bytes(block_bytes, limit_cap),
        ),
    )(x4)
    # (B, cpg, groups*HWp) -> (B, C, HWp) is a pure reshape (row-major identical).
    return out.reshape(B, C, HWp)


def _shuffle_general(x3: jax.Array, groups: int, block_budget: int,
                     limit_cap: int):
    """Shuffle for any spatial size (no padding/slicing).  Returns None if no
    legal block fits the VMEM budget (caller falls back to the padded path)."""
    B, C, HW = x3.shape
    cpg = C // groups
    itemsize = jnp.dtype(x3.dtype).itemsize

    row_bytes = groups * HW * itemsize  # one cpg-row across all groups
    i_cap = max(1, block_budget // row_bytes)
    if i_cap >= cpg:
        cpg_t = cpg
    else:
        # A cpg tile smaller than cpg must be a multiple of 8 (sublane rule).
        cands = [d for d in range(8, cpg + 1, 8) if cpg % d == 0 and d <= i_cap]
        cpg_t = max(cands) if cands else cpg

    bt_cap = max(1, block_budget // (cpg_t * row_bytes))
    Bt = _largest_divisor_leq(B, bt_cap)

    # v7x megacore: keep at least 2 grid steps when there is enough work to split.
    total_bytes = B * C * HW * itemsize
    if total_bytes >= 2 * _MiB and B >= 2 and (B // Bt) * (cpg // cpg_t) < 2:
        Bt = _largest_divisor_leq(B, max(1, B // 2))

    block_bytes = Bt * cpg_t * row_bytes
    if 4 * block_bytes + _VMEM_HEADROOM > limit_cap:
        return None

    x4 = x3.reshape(B, groups, cpg, HW)
    out = pl.pallas_call(
        _shuffle_tile_kernel,
        out_shape=jax.ShapeDtypeStruct((B, cpg, groups, HW), x3.dtype),
        grid=(B // Bt, cpg // cpg_t),
        in_specs=[
            pl.BlockSpec((Bt, groups, cpg_t, HW), lambda b, ci: (b, 0, ci, 0)),
        ],
        out_specs=pl.BlockSpec(
            (Bt, cpg_t, groups, HW), lambda b, ci: (b, ci, 0, 0)
        ),
        compiler_params=pltpu.CompilerParams(
            dimension_semantics=("parallel", "parallel"),
            vmem_limit_bytes=_vmem_limit_bytes(block_bytes, limit_cap),
        ),
    )(x4)
    return out.reshape(B, C, HW)


def channel_shuffle(x: jax.Array, groups: int) -> jax.Array:
    """x: (B, C, H, W), NCHW. Returns the channel-shuffled array (same shape/dtype)."""
    B, C, H, W = x.shape
    if C % groups != 0:
        raise ValueError("channels must be divisible by groups")
    if groups == 1:
        return x

    HW = H * W
    x3 = x.reshape(B, C, HW)

    cap = _vmem_capacity_bytes()
    limit_cap = (3 * cap) // 4  # ~48 MiB on v7x, ~96 MiB on v5e/v6e
    block_budget = min(
        _BLOCK_BYTES_BUDGET, max(256 * 1024, (limit_cap - _VMEM_HEADROOM) // 4)
    )

    if HW % _LANE == 0:
        out3 = _shuffle_lane_aligned(x3, groups, block_budget, limit_cap)
    else:
        out3 = _shuffle_general(x3, groups, block_budget, limit_cap)
        if out3 is None:
            # Rare fallback (block too large for VMEM): pad the spatial axis to
            # a lane multiple, run the pure-DMA path, slice the padding off.
            hw_p = ((HW + _LANE - 1) // _LANE) * _LANE
            x3p = jnp.pad(x3, ((0, 0), (0, 0), (0, hw_p - HW)))
            outp = _shuffle_lane_aligned(x3p, groups, block_budget, limit_cap)
            out3 = outp[..., :HW]

    return out3.reshape(B, C, H, W)


class ChannelShuffle:
    """JAX/Pallas equivalent of the PyTorch ChannelShuffle module (no params)."""

    def __init__(self, channelsNum: int, groupsNum: int):
        if channelsNum % groupsNum != 0:
            raise ValueError("channels must be divisible by groups")
        self.groups = groupsNum

    def __call__(self, x: jax.Array) -> jax.Array:
        return channel_shuffle(x, self.groups)


def _reference_channel_shuffle(x, groups):
    B, C, H, W = x.shape
    cpg = C // groups
    y = x.reshape(B, groups, cpg, H, W)
    y = jnp.transpose(y, (0, 2, 1, 3, 4))
    return y.reshape(B, C, H, W)


if __name__ == "__main__":
    key = jax.random.PRNGKey(0)

    # (shape, groups, dtype): lane-aligned pure-DMA path, non-aligned transpose
    # path (both loop orientations), batch folding, and a packed dtype.
    cases = [
        ((2, 4, 16, 16), 2, jnp.float32),   # HW = 256: pure-DMA path
        ((2, 8, 6, 6), 4, jnp.float32),     # HW = 36: in-kernel swap, groups > cpg
        ((2, 12, 5, 5), 3, jnp.float32),    # HW = 25: in-kernel swap, groups <= cpg
        ((4, 8, 8, 16), 2, jnp.float32),    # HW = 128: batch folding on DMA path
        ((2, 4, 16, 16), 2, jnp.bfloat16),  # packed dtype, pure-DMA path
    ]
    for (shape, groups, dtype) in cases:
        key, sub = jax.random.split(key)
        x = jax.random.normal(sub, shape, dtype=jnp.float32).astype(dtype)
        module = ChannelShuffle(shape[1], groups)
        out = jax.block_until_ready(module(x))
        ref = _reference_channel_shuffle(x, groups)
        assert out.shape == ref.shape and out.dtype == ref.dtype
        assert jnp.array_equal(out, ref), f"mismatch for {shape}, groups={groups}, {dtype}"

    print("KERNEL_OK")
</pallas_src>

<mosaic_0001>
module attributes {stable_mosaic.version = 11 : i64} {
  func.func @_copy_kernel(%arg0: i32, %arg1: i32, %arg2: i32, %arg3: memref<2x1x2x256xf32, #tpu.memory_space<vmem>>, %arg4: memref<2x2x256xf32, #tpu.memory_space<vmem>>) attributes {dimension_semantics = [#tpu.dimension_semantics<parallel>, #tpu.dimension_semantics<parallel>, #tpu.dimension_semantics<parallel>], iteration_bounds = array<i64: 1, 2, 1>, scalar_prefetch = 0 : i64, scratch_operands = 0 : i64, tpu.core_type = #tpu.core_type<tc>, window_params = [{transform_indices = @transform_0, window_bounds = array<i64: 2, 1, 2, 256>}, {transform_indices = @transform_1, window_bounds = array<i64: 2, 2, 256>}]} {
    %c0 = arith.constant 0 : index
    %c0_0 = arith.constant 0 : index
    %c0_1 = arith.constant 0 : index
    %c0_2 = arith.constant 0 : index
    %0 = vector.load %arg3[%c0, %c0_0, %c0_1, %c0_2] : memref<2x1x2x256xf32, #tpu.memory_space<vmem>>, vector<2x1x2x256xf32>
    %1 = vector.shape_cast %0 : vector<2x1x2x256xf32> to vector<2x2x256xf32>
    %c0_3 = arith.constant 0 : index
    %c0_4 = arith.constant 0 : index
    %c0_5 = arith.constant 0 : index
    %2 = vector.load %arg4[%c0_3, %c0_4, %c0_5] : memref<2x2x256xf32, #tpu.memory_space<vmem>>, vector<2x2x256xf32>
    tpu.vector_store %arg4[%c0_3, %c0_4, %c0_5], %1 {strides = array<i32>} : memref<2x2x256xf32, #tpu.memory_space<vmem>>, vector<2x2x256xf32>,
    return
  }
  func.func @transform_0(%arg0: i32, %arg1: i32, %arg2: i32) -> (i32, i32, i32, i32) {
    %c0_i32 = arith.constant 0 : i32
    %c0_i32_0 = arith.constant 0 : i32
    return %arg0, %arg1, %c0_i32, %arg2 : i32, i32, i32, i32
  }
  func.func @transform_1(%arg0: i32, %arg1: i32, %arg2: i32) -> (i32, i32, i32) {
    %c1_i32 = arith.constant 1 : i32
    %0 = arith.muli %arg1, %c1_i32 : i32
    %1 = arith.addi %0, %arg2 : i32
    %c0_i32 = arith.constant 0 : i32
    %c0_i32_0 = arith.constant 0 : i32
    return %arg0, %c0_i32, %1 : i32, i32, i32
  }
}

</mosaic_0001>

<llo_original>
// kernel: tpu_custom_call.1
$region0: #{tpu_custom_call.1}
  #allocation0 [shape = 'u32[]', space=smem, size = 0x4, offset = 0x4, fixed_abs, tag = 'smem constant byte address 0x4 - core index']
  #allocation1 [shape = 'u32[144,128]{1,0:T(1,128)}', space=vmem, size = 0x12000, scoped, tag = 'internal scratch']
  %s0 = inlined_call_operand.hbm [shape: f32[2,2,2,256], index: 0, kind: input, shape index: {}]
  %s1 = inlined_call_operand.hbm [shape: f32[2,2,512], index: 1, kind: output, shape index: {}]
  %s2 = sld [smem:[#allocation0]]
  $region41: #{tpu_custom_call.1} parent=0
    _
  %s4 = ssub.s32 1, %s2
  %s5 = scalar_select 0, %s4, %s2
  $region1: #{tpu_custom_call.1} parent=0
    #allocation2 [shape = 'u8[8192]{0}', space=vmem, size = 0x2000, scoped, tag = 'input window, operand 0']
    #allocation3 [shape = 's32[2]{0}', space=sflag, size = 0x8, scoped, tag = 'scoped memory for tpu_custom_call.1']
    #allocation4 [shape = 's32[2]{0}', space=sflag, size = 0x8, scoped, tag = 'scoped memory for tpu_custom_call.1']
    #allocation5 [shape = 'u8[8192]{0}', space=vmem, size = 0x2000, scoped, tag = 'output window, operand 0']
    %6 = vsyncpa [#allocation3], 0
    %s7 = scalar_lea.sflag [#allocation3], 1
    %8 = vsyncpa %s7, 0
    %9 = vsyncpa [#allocation4], 0
    %s10 = scalar_lea.sflag [#allocation4], 1
    %11 = vsyncpa %s10, 0
    loop: start=0, step=1, limit=4
    $region2: #{tpu_custom_call.1} parent=1 // loop_pre_header
      _
    $region3: #{tpu_custom_call.1} parent=1 // loop_header
      %s13 = sphi 0, %s17
      %p14 = scmp.ge.s32.totalorder %s13, 4
      %s20 = sphi 0, %s39
      %s21 = sphi 0, %s35
      %s22 = sphi 0, %s31
      %s23 = sphi 0, %s20
      %s24 = sphi 0, %s21
      %s25 = sphi 0, %s22
      %s26 = sphi 0, %s23
      %s27 = sphi 0, %s24
      %s28 = sphi 0, %s25
      %s46 = sphi 0, %s48
      %s49 = sphi 0, %s46
      %s50 = sphi 0, %s49
      %s66 = sphi 0, %s50
      %s76 = sphi 0, %s78
      %s79 = sphi 0, %s76
      %s80 = sphi 0, %s79
      %s96 = sphi 0, %s80
    $region4: #{tpu_custom_call.1} parent=1 // loop_header_branch
      %16 = sbr.rel (%p14) target = $region8
    $region5: #{tpu_custom_call.1} parent=1 // loop_body
      %s18 = ssub.s32 %s13, 1
      %s19 = ssub.s32 %s13, 2
      %s29 = sadd.s32 1, %s22
      %p30 = scmp.ge.s32.totalorder %s29, 1
      %s31 = scalar_select %p30, 0, %s29
      %s32 = sadd.s32 1, %s21
      %s33 = scalar_select %p30, %s32, %s21
      %p34 = scmp.ge.s32.totalorder %s33, 2
      %s35 = scalar_select %p34, 0, %s33
      %s36 = sadd.s32 1, %s20
      %s37 = scalar_select %p34, %s36, %s20
      %p38 = scmp.ge.s32.totalorder %s37, 1
      %s39 = scalar_select %p38, 0, %s37
      %s40 = ssub.s32 %s20, %s39
      %s41 = ssub.s32 %s21, %s35
      %s42 = sor.u32 %s40, %s41
      %s43 = ssub.s32 %s22, %s31
      %s44 = sor.u32 %s42, %s43
      %p45 = scmp.eq.s32.totalorder %s44, 0
      %s47 = sadd.s32 %s46, 1
      %s48 = scalar_select %p45, %s46, %s47
      %p51 = pneg %p45
      %p52 = scmp.eq.s32.totalorder %s13, 1
      %p53 = por %p51, %p52
      %p54 = scmp.ne.s32.totalorder %s46, %s49
      %p55 = scmp.eq.s32.totalorder %s13, 0
      %p56 = por %p54, %p55
      %p57 = scmp.ne.s32.totalorder %s46, %s49
      %p58 = scmp.eq.s32.totalorder %s18, 1
      %p59 = por %p57, %p58
      %p60 = scmp.ne.s32.totalorder %s49, %s50
      %p61 = scmp.eq.s32.totalorder %s18, 0
      %p62 = por %p60, %p61
      %p63 = scmp.ne.s32.totalorder %s49, %s50
      %p64 = scmp.eq.s32.totalorder %s19, 1
      %p65 = por %p63, %p64
      %p67 = scmp.ne.s32.totalorder %s50, %s66
      %p68 = scmp.eq.s32.totalorder %s19, 0
      %p69 = por %p67, %p68
      %s70 = sadd.s32 %s21, %s22
      %s71 = sadd.s32 %s35, %s31
      %s72 = ssub.s32 %s20, %s39
      %s73 = ssub.s32 %s70, %s71
      %s74 = sor.u32 %s72, %s73
      %p75 = scmp.eq.s32.totalorder %s74, 0
      %s77 = sadd.s32 %s76, 1
      %s78 = scalar_select %p75, %s76, %s77
      %p81 = pneg %p75
      %p82 = scmp.eq.s32.totalorder %s13, 1
      %p83 = por %p81, %p82
      %p84 = scmp.ne.s32.totalorder %s76, %s79
      %p85 = scmp.eq.s32.totalorder %s13, 0
      %p86 = por %p84, %p85
      %p87 = scmp.ne.s32.totalorder %s76, %s79
      %p88 = scmp.eq.s32.totalorder %s18, 1
      %p89 = por %p87, %p88
      %p90 = scmp.ne.s32.totalorder %s79, %s80
      %p91 = scmp.eq.s32.totalorder %s18, 0
      %p92 = por %p90, %p91
      %p93 = scmp.ne.s32.totalorder %s79, %s80
      %p94 = scmp.eq.s32.totalorder %s19, 1
      %p95 = por %p93, %p94
      %p97 = scmp.ne.s32.totalorder %s80, %s96
      %p98 = scmp.eq.s32.totalorder %s19, 0
      %p99 = por %p97, %p98
      %p100 = scmp.le.s32.totalorder 1, %s13
      %p101 = scmp.lt.s32.totalorder %s13, 3
      %p102 = pnand %p100, %p101
      %p103 = pneg %p102
      // Predicated region
      $region9: #{tpu_custom_call.1} parent=5 // pred_check
        _
      $region10: #{tpu_custom_call.1} parent=5 // pred_check_branch
        %105 = sbr.rel (%p102) target = $region12
      $region11: #{tpu_custom_call.1} parent=5 // pred_region
        %s106 = ssub.s32 %s13, 1
      $region12: #{tpu_custom_call.1} parent=5 // pred_fallthru
        _
      %p107 = scmp.lt.s32.totalorder %s13, 2
      // Predicated region
      $region13: #{tpu_custom_call.1} parent=5 // pred_check
        %p108 = pneg %p107
      $region14: #{tpu_custom_call.1} parent=5 // pred_check_branch
        %110 = sbr.rel (%p108) target = $region16
      $region15: #{tpu_custom_call.1} parent=5 // pred_region
        // Predicated region
        $region17: #{tpu_custom_call.1} parent=15 // pred_check
          %p111 = pneg %p56
        $region18: #{tpu_custom_call.1} parent=15 // pred_check_branch
          %113 = sbr.rel (%p111) target = $region20
        $region19: #{tpu_custom_call.1} parent=15 // pred_region
          %s114 = sand.u32 %s46, 1
          %s115 = scalar_lea.sflag [#allocation3], %s114
          %s116 = sand.u32 %s46, 1
          %s117 = smul.addr %s116, 8
          %s118 = scalar_lea.vmem [#allocation2], %s117
          %s119 = smul.u32 2, %s20
          %s120 = smul.u32 2, %s22
          %s122 = ssub.s32 128, 128
          %123 = vsyncadd %s115, %s122
          %s124 = smul.addr %s21, 2
          %s125 = sadd.s32 %s120, %s124
          %s126 = smul.addr %s119, 4
          %s127 = sadd.s32 %s125, %s126
          %s128 = smul.addr %s127, 32
          %s129 = scalar_lea.hbm %s0, %s128
          %s130 = sshll.u32 %s118, 4
          %s131 = int_to_ptr.vmem [resolvable:$true] %s130
          %136 = dma.hbm_to_vmem [thread:$0]  %s129, 128, %s131, %s115, 128, 64, 4
        $region20: #{tpu_custom_call.1} parent=15 // pred_fallthru
          _
      $region16: #{tpu_custom_call.1} parent=5 // pred_fallthru
        _
      %p137 = scmp.le.s32.totalorder 1, %s13
      %p138 = scmp.lt.s32.totalorder %s13, 3
      %p139 = pnand %p137, %p138
      %p140 = pneg %p139
      // Predicated region
      $region21: #{tpu_custom_call.1} parent=5 // pred_check
        _
      $region22: #{tpu_custom_call.1} parent=5 // pred_check_branch
        %142 = sbr.rel (%p139) target = $region24
      $region23: #{tpu_custom_call.1} parent=5 // pred_region
        %s143 = ssub.s32 %s13, 1
        %s144 = sand.u32 %s49, 1
        %s145 = scalar_lea.sflag [#allocation3], %s144
        %s146 = sand.u32 %s49, 1
        %s147 = smul.addr %s146, 8
        %s148 = scalar_lea.vmem [#allocation2], %s147
        // Predicated region
        $region25: #{tpu_custom_call.1} parent=23 // pred_check
          %p149 = pneg %p62
        $region26: #{tpu_custom_call.1} parent=23 // pred_check_branch
          %151 = sbr.rel (%p149) target = $region28
        $region27: #{tpu_custom_call.1} parent=23 // pred_region
          %152 = dma.done %s145, 128
        $region28: #{tpu_custom_call.1} parent=23 // pred_fallthru
          _
        %s153 = sand.u32 %s49, 1
        %s154 = scalar_lea.sflag [#allocation3], %s153
        %s155 = sand.u32 %s49, 1
        %s156 = smul.addr %s155, 8
        %s157 = scalar_lea.vmem [#allocation2], %s156
        %p158 = pneg %p62
        %p159 = pneg %p59
        %p160 = pneg %p92
        %p161 = pneg %p89
        %s162 = sand.u32 %s79, 1
        %s163 = scalar_lea.sflag [#allocation4], %s162
        %s164 = sand.u32 %s79, 1
        %s165 = smul.addr %s164, 8
        %s166 = scalar_lea.vmem [#allocation5], %s165
        %s167 = smul.u32 2, %s23
        %s168 = smul.u32 2, %s25
        %s169 = sadd.s32 %s24, %s25
        %s170 = smul.u32 2, %s23
        %s171 = smul.u32 2, %s169
        %v172 = vld [vmem:[%s148] sm:$0xf]
        %v173 = vld [vmem:[%s148 + $0x4] sm:$0xf]
        %174 = vst [vmem:[%s166] sm:$0xf] %v172
        %175 = vst [vmem:[%s166 + $0x4] sm:$0xf] %v173
        %s176 = sand.u32 %s79, 1
        %s177 = scalar_lea.sflag [#allocation4], %s176
        %s178 = sand.u32 %s79, 1
        %s179 = smul.addr %s178, 8
        %s180 = scalar_lea.vmem [#allocation5], %s179
        // Predicated region
        $region29: #{tpu_custom_call.1} parent=23 // pred_check
          %p181 = pneg %p89
        $region30: #{tpu_custom_call.1} parent=23 // pred_check_branch
          %183 = sbr.rel (%p181) target = $region32
        $region31: #{tpu_custom_call.1} parent=23 // pred_region
          %s184 = sadd.s32 %s24, %s25
          %s185 = smul.u32 2, %s23
          %s186 = smul.u32 2, %s184
          %s188 = ssub.s32 128, 128
          %189 = vsyncadd %s177, %s188
          %s190 = smul.addr %s185, 4
          %s191 = sadd.s32 %s186, %s190
          %s192 = smul.addr %s191, 32
          %s193 = scalar_lea.hbm %s1, %s192
          %s194 = sshll.u32 %s180, 4
          %s195 = int_to_ptr.vmem [resolvable:$true] %s194
          %200 = dma.vmem_to_hbm [thread:$0]  %s195, 128, %s193, %s177, 64, 128, 4
        $region32: #{tpu_custom_call.1} parent=23 // pred_fallthru
          _
      $region24: #{tpu_custom_call.1} parent=5 // pred_fallthru
        _
      %p201 = scmp.le.s32.totalorder 2, %s13
      // Predicated region
      $region33: #{tpu_custom_call.1} parent=5 // pred_check
        %p202 = pneg %p201
      $region34: #{tpu_custom_call.1} parent=5 // pred_check_branch
        %204 = sbr.rel (%p202) target = $region36
      $region35: #{tpu_custom_call.1} parent=5 // pred_region
        %s205 = ssub.s32 %s13, 2
        // Predicated region
        $region37: #{tpu_custom_call.1} parent=35 // pred_check
          %p206 = pneg %p95
        $region38: #{tpu_custom_call.1} parent=35 // pred_check_branch
          %208 = sbr.rel (%p206) target = $region40
        $region39: #{tpu_custom_call.1} parent=35 // pred_region
          %s209 = sand.u32 %s80, 1
          %s210 = scalar_lea.sflag [#allocation4], %s209
          %s211 = sand.u32 %s80, 1
          %s212 = smul.addr %s211, 8
          %s213 = scalar_lea.vmem [#allocation5], %s212
          %214 = dma.done %s210, 128
        $region40: #{tpu_custom_call.1} parent=35 // pred_fallthru
          _
      $region36: #{tpu_custom_call.1} parent=5 // pred_fallthru
        _
    $region6: #{tpu_custom_call.1} parent=1 // loop_footer
      %s17 = sadd.s32 1, %s13
    $region7: #{tpu_custom_call.1} parent=1 // loop_footer_branch
      %12 = sbr.rel target = $region3
    $region8: #{tpu_custom_call.1} parent=1 // loop_exit
      _
    %215 = vsyncpa [#allocation3], 1
    %s216 = scalar_lea.sflag [#allocation3], 1
    %217 = vsyncpa %s216, 1
    %218 = vsyncpa [#allocation4], 1
    %s219 = scalar_lea.sflag [#allocation4], 1
    %220 = vsyncpa %s219, 1

</llo_original>
